<compile_context>
chip_gen: v7x
topology: tpu7x:2x2x1
jax: 0.10.0
libtpu: 0.0.40
codegen_flags: <defaults>
</compile_context>

<pallas_src>
import math
import jax
import jax.numpy as jnp
from jax.experimental import pallas as pl
from jax.experimental.pallas import tpu as pltpu


def _round_up(x: int, n: int) -> int:
    return ((x + n - 1) // n) * n


def _client_front_kernel(e_ref, n_ref, g_ref, ws_ref, wn_ref, c_ref):
    # e_ref:  (tm, k*d)   gathered embeddings, k folded into lanes
    # n_ref:  (tm, k*m)   gaussian noise coords, k folded into lanes
    # g_ref:  (k*d, k*d)  0/1 same-group matrix (block-diag of ones)
    # ws_ref: (k*d, k*N)  block-diagonal rotation, signal rows
    # wn_ref: (k*m, k*N)  block-diagonal rotation, noise rows
    # c_ref:  (tm, k*N)   ciphertext tile

    # Noise-side rotation is independent of the normalize chain: issue this
    # MXU matmul first so it overlaps with the EUP rsqrt work below.
    c_noi = jnp.dot(n_ref[...], wn_ref[...], preferred_element_type=jnp.float32)

    e = e_ref[...]
    # Per-d-group L2 norm, lane-dense: (e*e) @ G broadcasts each group's
    # sum-of-squares back to every lane of that group (no 16-lane reductions).
    sumsq = jnp.dot(e * e, g_ref[...], preferred_element_type=jnp.float32)
    # F.normalize eps=1e-12 on the norm == clamp the squared norm at 1e-24.
    e_n = e * jax.lax.rsqrt(jnp.maximum(sumsq, 1e-24))

    c_sig = jnp.dot(e_n, ws_ref[...], preferred_element_type=jnp.float32)
    c_ref[...] = (c_sig + c_noi).astype(c_ref.dtype)


def client_front_pallas(tokens, embed, K, noise_key, *, sigma=1.0,
                        rows_per_tile=2048):
    """tokens: (B,T) int32, embed: (vocab,k,d), K: (N,N) orthogonal,
    noise_key: PRNG key for the Gaussian padding noise.

    Returns (C, noise): ciphertext C (B, T, k, N) float32 and the noise that
    was mixed in, (B, T, k, m), so callers/tests can verify exactly."""
    B, T = tokens.shape
    vocab, k_vec, d = embed.shape
    N = K.shape[0]
    m = N - d
    kd, km, kN = k_vec * d, k_vec * m, k_vec * N
    M2 = B * T

    # ---- Row tiling: big tiles, f32 sublane multiple of 8 (bump to 16 if the
    # inputs are ever narrowed to bf16), and >=2 grid steps whenever possible
    # so a dual-TC chip (v7x) gets both cores busy on the "parallel" axis.
    tm = min(rows_per_tile, _round_up(M2, 8))
    if M2 >= 16 and pl.cdiv(M2, tm) < 2:
        tm = _round_up(pl.cdiv(M2, 2), 8)
    M2_pad = _round_up(M2, tm)
    grid = (M2_pad // tm,)

    # ---- XLA glue: gather with PRE-padded tokens (4 B/row, no pad pass over
    # the gathered rows themselves).
    tok_flat = tokens.reshape(M2).astype(jnp.int32)
    if M2_pad != M2:
        tok_flat = jnp.pad(tok_flat, (0, M2_pad - M2))
    embed2 = embed.reshape(vocab, kd).astype(jnp.float32)       # (vocab, k*d)
    E2 = embed2[tok_flat]                                       # (M2_pad, k*d)

    # Noise generated directly at the padded, lane-folded shape: no pad/reshape
    # copy in HBM. (Same values the module's torch.randn would play the role of.)
    noise2 = jax.random.normal(noise_key, (M2_pad, km), dtype=jnp.float32) * sigma

    # Fused block-diagonal rotation slabs (built once, VMEM-resident):
    #   W_sig[g*d + j, h*N + n] = (g==h) * K[n, j]
    #   W_noi[g*m + j, h*N + n] = (g==h) * K[n, d + j]
    eye_k = jnp.eye(k_vec, dtype=jnp.float32)
    Kf = K.astype(jnp.float32)
    W_sig = jnp.einsum('gh,dn->gdhn', eye_k, Kf[:, :d].T).reshape(kd, kN)
    W_noi = jnp.einsum('gh,mn->gmhn', eye_k, Kf[:, d:].T).reshape(km, kN)

    # 0/1 same-group matrix for the per-d-group norm broadcast.
    gid = jnp.arange(kd) // d
    G = (gid[:, None] == gid[None, :]).astype(jnp.float32)      # (k*d, k*d)

    C2 = pl.pallas_call(
        _client_front_kernel,
        out_shape=jax.ShapeDtypeStruct((M2_pad, kN), jnp.float32),
        grid_spec=pltpu.PrefetchScalarGridSpec(
            num_scalar_prefetch=0,
            grid=grid,
            in_specs=[
                pl.BlockSpec((tm, kd), lambda i: (i, 0)),        # E tile
                pl.BlockSpec((tm, km), lambda i: (i, 0)),        # noise tile
                pl.BlockSpec((kd, kd), lambda i: (0, 0)),        # G (resident)
                pl.BlockSpec((kd, kN), lambda i: (0, 0)),        # W_sig (resident)
                pl.BlockSpec((km, kN), lambda i: (0, 0)),        # W_noi (resident)
            ],
            out_specs=pl.BlockSpec((tm, kN), lambda i: (i, 0)),
        ),
        compiler_params=pltpu.CompilerParams(
            dimension_semantics=("parallel",),
            # Let XLA fold the embedding gather and the RNG producer into the
            # kernel's input pipeline instead of round-tripping through HBM.
            allow_input_fusion=[True, True, False, False, False],
            # ~8 MiB per-tile footprint at tm=2048; generous headroom, still
            # below v7x's 64 MiB physical VMEM.
            vmem_limit_bytes=48 * 1024 * 1024,
        ),
    )(E2, noise2, G, W_sig, W_noi)

    if M2_pad != M2:
        C2 = C2[:M2]
    C = C2.reshape(B, T, k_vec, N)
    noise = noise2[:M2].reshape(B, T, k_vec, m)   # returned for verification
    return C, noise


def _reference(tokens, embed, noise, K):
    E = embed[tokens]
    nrm = jnp.sqrt(jnp.sum(E * E, axis=-1, keepdims=True))
    E = E / jnp.maximum(nrm, 1e-12)
    V = jnp.concatenate([E, noise], axis=-1)
    return jnp.einsum('ij,btkj->btki', K, V)


if __name__ == "__main__":
    # Small synthetic config (mirrors module __init__ shapes).
    vocab, d_signal, m_noise, k_vec, sigma = 64, 16, 16, 8, 1.0
    N = d_signal + m_noise
    B, T = 2, 8

    root = jax.random.PRNGKey(0)
    k_emb, k_tok, k_noise, k_rot = jax.random.split(root, 4)

    # embed ~ N(0,1)/sqrt(d*k), shape (vocab, k, d).
    embed = jax.random.normal(k_emb, (vocab, k_vec, d_signal),
                              dtype=jnp.float32) / math.sqrt(d_signal * k_vec)

    tokens = jax.random.randint(k_tok, (B, T), 0, vocab, dtype=jnp.int32)

    # random_orthogonal(N): orthogonal via QR of a Gaussian matrix (glue).
    A = jax.random.normal(k_rot, (N, N), dtype=jnp.float32)
    Q, R = jnp.linalg.qr(A)
    K = Q * jnp.sign(jnp.diag(R))[None, :]

    C, noise_used = client_front_pallas(tokens, embed, K, k_noise, sigma=sigma)
    C = jax.block_until_ready(C)

    C_ref = _reference(tokens, embed, noise_used, K)
    assert C.shape == (B, T, k_vec, N)
    assert noise_used.shape == (B, T, k_vec, m_noise)
    assert jnp.allclose(C, C_ref, atol=2e-5, rtol=2e-5), "mismatch vs reference"

    # Decryption sanity check: K^T C recovers [normalized signal ; noise].
    V_rec = jnp.einsum('ji,btkj->btki', K, C)
    E_n = embed[tokens]
    E_n = E_n / jnp.maximum(jnp.linalg.norm(E_n, axis=-1, keepdims=True), 1e-12)
    assert jnp.allclose(V_rec[..., :d_signal], E_n, atol=2e-5, rtol=2e-5)

    print("KERNEL_OK")
</pallas_src>

<mosaic_0001>
module attributes {stable_mosaic.version = 11 : i64} {
  func.func @_client_front_kernel(%arg0: i32, %arg1: memref<8x128xf32, #tpu.memory_space<vmem>>, %arg2: memref<8x128xf32, #tpu.memory_space<vmem>>, %arg3: memref<128x128xf32, #tpu.memory_space<vmem>>, %arg4: memref<128x256xf32, #tpu.memory_space<vmem>>, %arg5: memref<128x256xf32, #tpu.memory_space<vmem>>, %arg6: memref<8x256xf32, #tpu.memory_space<vmem>>) attributes {dimension_semantics = [#tpu.dimension_semantics<parallel>], iteration_bounds = array<i64: 2>, scalar_prefetch = 0 : i64, scratch_operands = 0 : i64, tpu.core_type = #tpu.core_type<tc>, window_params = [{transform_indices = @transform_0, window_bounds = array<i64: 8, 128>}, {transform_indices = @transform_1, window_bounds = array<i64: 8, 128>}, {pipeline_mode = #tpu.pipeline_mode<synchronous>, transform_indices = @transform_2, window_bounds = array<i64: 128, 128>}, {pipeline_mode = #tpu.pipeline_mode<synchronous>, transform_indices = @transform_3, window_bounds = array<i64: 128, 256>}, {pipeline_mode = #tpu.pipeline_mode<synchronous>, transform_indices = @transform_4, window_bounds = array<i64: 128, 256>}, {transform_indices = @transform_5, window_bounds = array<i64: 8, 256>}]} {
    %c0 = arith.constant 0 : index
    %c0_0 = arith.constant 0 : index
    %0 = vector.load %arg2[%c0, %c0_0] : memref<8x128xf32, #tpu.memory_space<vmem>>, vector<8x128xf32>
    %c0_1 = arith.constant 0 : index
    %c0_2 = arith.constant 0 : index
    %1 = vector.load %arg5[%c0_1, %c0_2] : memref<128x256xf32, #tpu.memory_space<vmem>>, vector<128x256xf32>
    %cst = arith.constant dense<0.000000e+00> : vector<8x256xf32>
    %2 = tpu.matmul %0, %1, %cst {dimension_numbers = #tpu.dot_dimension_numbers<[1], [0], [0], [1], [0, 0, 1, 1], [], []>} : vector<8x128xf32>, vector<128x256xf32>, vector<8x256xf32> -> vector<8x256xf32>
    %c0_3 = arith.constant 0 : index
    %c0_4 = arith.constant 0 : index
    %3 = vector.load %arg1[%c0_3, %c0_4] : memref<8x128xf32, #tpu.memory_space<vmem>>, vector<8x128xf32>
    %4 = arith.mulf %3, %3 : vector<8x128xf32>
    %c0_5 = arith.constant 0 : index
    %c0_6 = arith.constant 0 : index
    %5 = vector.load %arg3[%c0_5, %c0_6] : memref<128x128xf32, #tpu.memory_space<vmem>>, vector<128x128xf32>
    %cst_7 = arith.constant dense<0.000000e+00> : vector<8x128xf32>
    %6 = tpu.matmul %4, %5, %cst_7 {dimension_numbers = #tpu.dot_dimension_numbers<[1], [0], [0], [1], [0, 0, 1, 1], [], []>} : vector<8x128xf32>, vector<128x128xf32>, vector<8x128xf32> -> vector<8x128xf32>
    %cst_8 = arith.constant 1.000000e-24 : f32
    %7 = vector.broadcast %cst_8 : f32 to vector<8x128xf32>
    %8 = arith.maximumf %6, %7 : vector<8x128xf32>
    %9 = math.rsqrt %8 : vector<8x128xf32>
    %10 = arith.mulf %3, %9 : vector<8x128xf32>
    %c0_9 = arith.constant 0 : index
    %c0_10 = arith.constant 0 : index
    %11 = vector.load %arg4[%c0_9, %c0_10] : memref<128x256xf32, #tpu.memory_space<vmem>>, vector<128x256xf32>
    %cst_11 = arith.constant dense<0.000000e+00> : vector<8x256xf32>
    %12 = tpu.matmul %10, %11, %cst_11 {dimension_numbers = #tpu.dot_dimension_numbers<[1], [0], [0], [1], [0, 0, 1, 1], [], []>} : vector<8x128xf32>, vector<128x256xf32>, vector<8x256xf32> -> vector<8x256xf32>
    %13 = arith.addf %12, %2 : vector<8x256xf32>
    %c0_12 = arith.constant 0 : index
    %c0_13 = arith.constant 0 : index
    %14 = vector.load %arg6[%c0_12, %c0_13] : memref<8x256xf32, #tpu.memory_space<vmem>>, vector<8x256xf32>
    tpu.vector_store %arg6[%c0_12, %c0_13], %13 {strides = array<i32>} : memref<8x256xf32, #tpu.memory_space<vmem>>, vector<8x256xf32>,
    return
  }
  func.func @transform_0(%arg0: i32) -> (i32, i32) {
    %c0_i32 = arith.constant 0 : i32
    %c0_i32_0 = arith.constant 0 : i32
    return %arg0, %c0_i32 : i32, i32
  }
  func.func @transform_1(%arg0: i32) -> (i32, i32) {
    %c0_i32 = arith.constant 0 : i32
    %c0_i32_0 = arith.constant 0 : i32
    return %arg0, %c0_i32 : i32, i32
  }
  func.func @transform_2(%arg0: i32) -> (i32, i32) {
    %c0_i32 = arith.constant 0 : i32
    %c0_i32_0 = arith.constant 0 : i32
    %c0_i32_1 = arith.constant 0 : i32
    return %c0_i32, %c0_i32_0 : i32, i32
  }
  func.func @transform_3(%arg0: i32) -> (i32, i32) {
    %c0_i32 = arith.constant 0 : i32
    %c0_i32_0 = arith.constant 0 : i32
    %c0_i32_1 = arith.constant 0 : i32
    return %c0_i32, %c0_i32_0 : i32, i32
  }
  func.func @transform_4(%arg0: i32) -> (i32, i32) {
    %c0_i32 = arith.constant 0 : i32
    %c0_i32_0 = arith.constant 0 : i32
    %c0_i32_1 = arith.constant 0 : i32
    return %c0_i32, %c0_i32_0 : i32, i32
  }
  func.func @transform_5(%arg0: i32) -> (i32, i32) {
    %c0_i32 = arith.constant 0 : i32
    %c0_i32_0 = arith.constant 0 : i32
    return %arg0, %c0_i32 : i32, i32
  }
}

</mosaic_0001>

<llo_original>
// kernel: tpu_custom_call.1
$region0: #{tpu_custom_call.1}
  #allocation0 [shape = 'u32[]', space=smem, size = 0x4, offset = 0x4, fixed_abs, tag = 'smem constant byte address 0x4 - core index']
  #allocation1 [shape = 'u32[144,128]{1,0:T(1,128)}', space=vmem, size = 0x12000, scoped, tag = 'internal scratch']
  %s0 = inlined_call_operand.hbm [shape: f32[16,128], index: 0, kind: input, shape index: {}]
  %s1 = inlined_call_operand.hbm [shape: f32[16,128], index: 1, kind: input, shape index: {}]
  %s2 = inlined_call_operand.hbm [shape: f32[128,128], index: 2, kind: input, shape index: {}]
  %s3 = inlined_call_operand.hbm [shape: f32[128,256], index: 3, kind: input, shape index: {}]
  %s4 = inlined_call_operand.hbm [shape: f32[128,256], index: 4, kind: input, shape index: {}]
  %s5 = inlined_call_operand.hbm [shape: f32[16,256], index: 5, kind: output, shape index: {}]
  %s6 = sld [smem:[#allocation0]]
  $region73: #{tpu_custom_call.1} parent=0
    _
  %s8 = ssub.s32 1, %s6
  %s9 = scalar_select 0, %s8, %s6
  $region1: #{tpu_custom_call.1} parent=0
    #allocation2 [shape = 'u8[8192]{0}', space=vmem, size = 0x2000, scoped, tag = 'input window, operand 0']
    #allocation3 [shape = 's32[2]{0}', space=sflag, size = 0x8, scoped, tag = 'scoped memory for tpu_custom_call.1']
    #allocation4 [shape = 's32[2]{0}', space=sflag, size = 0x8, scoped, tag = 'scoped memory for tpu_custom_call.1']
    #allocation5 [shape = 'u8[8192]{0}', space=vmem, size = 0x2000, scoped, tag = 'input window, operand 1']
    #allocation6 [shape = 's32[2]{0}', space=sflag, size = 0x8, scoped, tag = 'scoped memory for tpu_custom_call.1']
    #allocation7 [shape = 'u8[65536]{0}', space=vmem, size = 0x10000, scoped, tag = 'input window, operand 2, single buffered']
    #allocation8 [shape = 'u8[131072]{0}', space=vmem, size = 0x20000, scoped, tag = 'input window, operand 3, single buffered']
    #allocation9 [shape = 's32[1]{0}', space=sflag, size = 0x4, scoped, tag = 'scoped memory for tpu_custom_call.1']
    #allocation10 [shape = 'u8[131072]{0}', space=vmem, size = 0x20000, scoped, tag = 'input window, operand 4, single buffered']
    #allocation11 [shape = 'u8[16384]{0}', space=vmem, size = 0x4000, scoped, tag = 'output window, operand 0']
    %10 = vsyncpa [#allocation3], 0
    %s11 = scalar_lea.sflag [#allocation3], 1
    %12 = vsyncpa %s11, 0
    %13 = vsyncpa [#allocation6], 0
    %s14 = scalar_lea.sflag [#allocation6], 1
    %15 = vsyncpa %s14, 0
    %16 = vsyncpa [#allocation9], 0
    %17 = vsyncpa [#allocation4], 0
    %s18 = scalar_lea.sflag [#allocation4], 1
    %19 = vsyncpa %s18, 0
    loop: start=0, step=1, limit=4
    $region2: #{tpu_custom_call.1} parent=1 // loop_pre_header
      _
    $region3: #{tpu_custom_call.1} parent=1 // loop_header
      %s21 = sphi 0, %s25
      %p22 = scmp.ge.s32.totalorder %s21, 4
      %s31 = sphi 0, %s33
      %s34 = sphi 0, %s31
      %s35 = sphi 0, %s34
      %s51 = sphi 0, %s35
      %s57 = sphi 0, %s59
      %s60 = sphi 0, %s57
      %s61 = sphi 0, %s60
      %s77 = sphi 0, %s61
      %s81 = sphi 0, %s81
      %s83 = sphi 0, %s81
      %s84 = sphi 0, %s83
      %s98 = sphi 0, %s84
      %s102 = sphi 0, %s102
      %s104 = sphi 0, %s102
      %s105 = sphi 0, %s104
      %s119 = sphi 0, %s105
      %s123 = sphi 0, %s123
      %s125 = sphi 0, %s123
      %s126 = sphi 0, %s125
      %s140 = sphi 0, %s126
      %s146 = sphi 0, %s148
      %s149 = sphi 0, %s146
      %s150 = sphi 0, %s149
      %s166 = sphi 0, %s150
    $region4: #{tpu_custom_call.1} parent=1 // loop_header_branch
      %24 = sbr.rel (%p22) target = $region8
    $region5: #{tpu_custom_call.1} parent=1 // loop_body
      %s26 = ssub.s32 %s21, 1
      %s27 = ssub.s32 %s21, 2
      %s28 = sadd.s32 %s21, 1
      %s29 = ssub.s32 %s21, %s28
      %p30 = scmp.eq.s32.totalorder %s29, 0
      %s32 = sadd.s32 %s31, 1
      %s33 = scalar_select %p30, %s31, %s32
      %p36 = pneg %p30
      %p37 = scmp.eq.s32.totalorder %s21, 1
      %p38 = por %p36, %p37
      %p39 = scmp.ne.s32.totalorder %s31, %s34
      %p40 = scmp.eq.s32.totalorder %s21, 0
      %p41 = por %p39, %p40
      %p42 = scmp.ne.s32.totalorder %s31, %s34
      %p43 = scmp.eq.s32.totalorder %s26, 1
      %p44 = por %p42, %p43
      %p45 = scmp.ne.s32.totalorder %s34, %s35
      %p46 = scmp.eq.s32.totalorder %s26, 0
      %p47 = por %p45, %p46
      %p48 = scmp.ne.s32.totalorder %s34, %s35
      %p49 = scmp.eq.s32.totalorder %s27, 1
      %p50 = por %p48, %p49
      %p52 = scmp.ne.s32.totalorder %s35, %s51
      %p53 = scmp.eq.s32.totalorder %s27, 0
      %p54 = por %p52, %p53
      %s55 = ssub.s32 %s21, %s28
      %p56 = scmp.eq.s32.totalorder %s55, 0
      %s58 = sadd.s32 %s57, 1
      %s59 = scalar_select %p56, %s57, %s58
      %p62 = pneg %p56
      %p63 = scmp.eq.s32.totalorder %s21, 1
      %p64 = por %p62, %p63
      %p65 = scmp.ne.s32.totalorder %s57, %s60
      %p66 = scmp.eq.s32.totalorder %s21, 0
      %p67 = por %p65, %p66
      %p68 = scmp.ne.s32.totalorder %s57, %s60
      %p69 = scmp.eq.s32.totalorder %s26, 1
      %p70 = por %p68, %p69
      %p71 = scmp.ne.s32.totalorder %s60, %s61
      %p72 = scmp.eq.s32.totalorder %s26, 0
      %p73 = por %p71, %p72
      %p74 = scmp.ne.s32.totalorder %s60, %s61
      %p75 = scmp.eq.s32.totalorder %s27, 1
      %p76 = por %p74, %p75
      %p78 = scmp.ne.s32.totalorder %s61, %s77
      %p79 = scmp.eq.s32.totalorder %s27, 0
      %p80 = por %p78, %p79
      %s82 = sadd.s32 %s81, 1
      %p85 = scmp.eq.s32.totalorder %s21, 1
      %p86 = scmp.ne.s32.totalorder %s81, %s83
      %p87 = scmp.eq.s32.totalorder %s21, 0
      %p88 = por %p86, %p87
      %p89 = scmp.ne.s32.totalorder %s81, %s83
      %p90 = scmp.eq.s32.totalorder %s26, 1
      %p91 = por %p89, %p90
      %p92 = scmp.ne.s32.totalorder %s83, %s84
      %p93 = scmp.eq.s32.totalorder %s26, 0
      %p94 = por %p92, %p93
      %p95 = scmp.ne.s32.totalorder %s83, %s84
      %p96 = scmp.eq.s32.totalorder %s27, 1
      %p97 = por %p95, %p96
      %p99 = scmp.ne.s32.totalorder %s84, %s98
      %p100 = scmp.eq.s32.totalorder %s27, 0
      %p101 = por %p99, %p100
      %s103 = sadd.s32 %s102, 1
      %p106 = scmp.eq.s32.totalorder %s21, 1
      %p107 = scmp.ne.s32.totalorder %s102, %s104
      %p108 = scmp.eq.s32.totalorder %s21, 0
      %p109 = por %p107, %p108
      %p110 = scmp.ne.s32.totalorder %s102, %s104
      %p111 = scmp.eq.s32.totalorder %s26, 1
      %p112 = por %p110, %p111
      %p113 = scmp.ne.s32.totalorder %s104, %s105
      %p114 = scmp.eq.s32.totalorder %s26, 0
      %p115 = por %p113, %p114
      %p116 = scmp.ne.s32.totalorder %s104, %s105
      %p117 = scmp.eq.s32.totalorder %s27, 1
      %p118 = por %p116, %p117
      %p120 = scmp.ne.s32.totalorder %s105, %s119
      %p121 = scmp.eq.s32.totalorder %s27, 0
      %p122 = por %p120, %p121
      %s124 = sadd.s32 %s123, 1
      %p127 = scmp.eq.s32.totalorder %s21, 1
      %p128 = scmp.ne.s32.totalorder %s123, %s125
      %p129 = scmp.eq.s32.totalorder %s21, 0
      %p130 = por %p128, %p129
      %p131 = scmp.ne.s32.totalorder %s123, %s125
      %p132 = scmp.eq.s32.totalorder %s26, 1
      %p133 = por %p131, %p132
      %p134 = scmp.ne.s32.totalorder %s125, %s126
      %p135 = scmp.eq.s32.totalorder %s26, 0
      %p136 = por %p134, %p135
      %p137 = scmp.ne.s32.totalorder %s125, %s126
      %p138 = scmp.eq.s32.totalorder %s27, 1
      %p139 = por %p137, %p138
      %p141 = scmp.ne.s32.totalorder %s126, %s140
      %p142 = scmp.eq.s32.totalorder %s27, 0
      %p143 = por %p141, %p142
      %s144 = ssub.s32 %s21, %s28
      %p145 = scmp.eq.s32.totalorder %s144, 0
      %s147 = sadd.s32 %s146, 1
      %s148 = scalar_select %p145, %s146, %s147
      %p151 = pneg %p145
      %p152 = scmp.eq.s32.totalorder %s21, 1
      %p153 = por %p151, %p152
      %p154 = scmp.ne.s32.totalorder %s146, %s149
      %p155 = scmp.eq.s32.totalorder %s21, 0
      %p156 = por %p154, %p155
      %p157 = scmp.ne.s32.totalorder %s146, %s149
      %p158 = scmp.eq.s32.totalorder %s26, 1
      %p159 = por %p157, %p158
      %p160 = scmp.ne.s32.totalorder %s149, %s150
      %p161 = scmp.eq.s32.totalorder %s26, 0
      %p162 = por %p160, %p161
      %p163 = scmp.ne.s32.totalorder %s149, %s150
      %p164 = scmp.eq.s32.totalorder %s27, 1
      %p165 = por %p163, %p164
      %p167 = scmp.ne.s32.totalorder %s150, %s166
      %p168 = scmp.eq.s32.totalorder %s27, 0
      %p169 = por %p167, %p168
      %p170 = scmp.le.s32.totalorder 1, %s21
      %p171 = scmp.lt.s32.totalorder %s21, 3
      %p172 = pnand %p170, %p171
      %p173 = pneg %p172
      // Predicated region
      $region9: #{tpu_custom_call.1} parent=5 // pred_check
        _
      $region10: #{tpu_custom_call.1} parent=5 // pred_check_branch
        %175 = sbr.rel (%p172) target = $region12
      $region11: #{tpu_custom_call.1} parent=5 // pred_region
        %s176 = ssub.s32 %s21, 1
        // Predicated region
        $region13: #{tpu_custom_call.1} parent=11 // pred_check
          %p177 = pneg %p94
        $region14: #{tpu_custom_call.1} parent=11 // pred_check_branch
          %179 = sbr.rel (%p177) target = $region16
        $region15: #{tpu_custom_call.1} parent=11 // pred_region
          %s181 = ssub.s32 2048, 2048
          %182 = vsyncadd [#allocation6], %s181
          %s183 = sshll.u32 [#allocation7], 4
          %s184 = int_to_ptr.vmem [resolvable:$true] %s183
          %189 = dma.hbm_to_vmem [thread:$0]  %s2, 2048, %s184, [#allocation6], 128, 128, 8
        $region16: #{tpu_custom_call.1} parent=11 // pred_fallthru
          _
        // Predicated region
        $region17: #{tpu_custom_call.1} parent=11 // pred_check
          %p190 = pneg %p115
        $region18: #{tpu_custom_call.1} parent=11 // pred_check_branch
          %192 = sbr.rel (%p190) target = $region20
        $region19: #{tpu_custom_call.1} parent=11 // pred_region
          %s194 = ssub.s32 4096, 4096
          %195 = vsyncadd [#allocation9], %s194
          %s196 = sshll.u32 [#allocation8], 4
          %s197 = int_to_ptr.vmem [resolvable:$true] %s196
          %202 = dma.hbm_to_vmem [thread:$0]  %s3, 4096, %s197, [#allocation9], 256, 256, 16
        $region20: #{tpu_custom_call.1} parent=11 // pred_fallthru
          _
        // Predicated region
        $region21: #{tpu_custom_call.1} parent=11 // pred_check
          %p203 = pneg %p136
        $region22: #{tpu_custom_call.1} parent=11 // pred_check_branch
          %205 = sbr.rel (%p203) target = $region24
        $region23: #{tpu_custom_call.1} parent=11 // pred_region
          %s207 = ssub.s32 4096, 4096
          %208 = vsyncadd [#allocation9], %s207
          %s209 = sshll.u32 [#allocation10], 4
          %s210 = int_to_ptr.vmem [resolvable:$true] %s209
          %215 = dma.hbm_to_vmem [thread:$0]  %s4, 4096, %s210, [#allocation9], 256, 256, 16
        $region24: #{tpu_custom_call.1} parent=11 // pred_fallthru
          _
      $region12: #{tpu_custom_call.1} parent=5 // pred_fallthru
        _
      %p216 = scmp.lt.s32.totalorder %s21, 2
      // Predicated region
      $region25: #{tpu_custom_call.1} parent=5 // pred_check
        %p217 = pneg %p216
      $region26: #{tpu_custom_call.1} parent=5 // pred_check_branch
        %219 = sbr.rel (%p217) target = $region28
      $region27: #{tpu_custom_call.1} parent=5 // pred_region
        // Predicated region
        $region29: #{tpu_custom_call.1} parent=27 // pred_check
          %p220 = pneg %p41
        $region30: #{tpu_custom_call.1} parent=27 // pred_check_branch
          %222 = sbr.rel (%p220) target = $region32
        $region31: #{tpu_custom_call.1} parent=27 // pred_region
          %s223 = sand.u32 %s31, 1
          %s224 = scalar_lea.sflag [#allocation3], %s223
          %s225 = sand.u32 %s31, 1
          %s226 = smul.addr %s225, 8
          %s227 = scalar_lea.vmem [#allocation2], %s226
          %s229 = ssub.s32 128, 128
          %230 = vsyncadd %s224, %s229
          %s231 = smul.addr %s21, 128
          %s232 = scalar_lea.hbm %s0, %s231
          %s234 = sshll.u32 %s227, 4
          %s235 = int_to_ptr.vmem [resolvable:$true] %s234
          %237 = dma.hbm_to_vmem [thread:$0]  %s232, 128, %s235, %s224
        $region32: #{tpu_custom_call.1} parent=27 // pred_fallthru
          _
        // Predicated region
        $region33: #{tpu_custom_call.1} parent=27 // pred_check
          %p238 = pneg %p67
        $region34: #{tpu_custom_call.1} parent=27 // pred_check_branch
          %240 = sbr.rel (%p238) target = $region36
        $region35: #{tpu_custom_call.1} parent=27 // pred_region
          %s241 = sand.u32 %s21, 1
          %s242 = scalar_lea.sflag [#allocation6], %s241
          %s243 = sand.u32 %s57, 1
          %s244 = smul.addr %s243, 8
          %s245 = scalar_lea.vmem [#allocation5], %s244
          %s247 = ssub.s32 128, 128
          %248 = vsyncadd %s242, %s247
          %s249 = smul.addr %s21, 128
          %s250 = scalar_lea.hbm %s1, %s249
          %s252 = sshll.u32 %s245, 4
          %s253 = int_to_ptr.vmem [resolvable:$true] %s252
          %255 = dma.hbm_to_vmem [thread:$0]  %s250, 128, %s253, %s242
        $region36: #{tpu_custom_call.1} parent=27 // pred_fallthru
          _
      $region28: #{tpu_custom_call.1} parent=5 // pred_fallthru
        _
      %p256 = scmp.le.s32.totalorder 1, %s21
      %p257 = scmp.lt.s32.totalorder %s21, 3
      %p258 = pnand %p256, %p257
      %p259 = pneg %p258
      // Predicated region
      $region37: #{tpu_custom_call.1} parent=5 // pred_check
        _
      $region38: #{tpu_custom_call.1} parent=5 // pred_check_branch
        %261 = sbr.rel (%p258) target = $region40
      $region39: #{tpu_custom_call.1} parent=5 // pred_region
        %s262 = ssub.s32 %s21, 1
        %s263 = sand.u32 %s34, 1
        %s264 = scalar_lea.sflag [#allocation3], %s263
        %s265 = sand.u32 %s34, 1
        %s266 = smul.addr %s265, 8
        %s267 = scalar_lea.vmem [#allocation2], %s266
        // Predicated region
        $region41: #{tpu_custom_call.1} parent=39 // pred_check
          %p268 = pneg %p47
        $region42: #{tpu_custom_call.1} parent=39 // pred_check_branch
          %270 = sbr.rel (%p268) target = $region44
        $region43: #{tpu_custom_call.1} parent=39 // pred_region
          %271 = dma.done %s264, 128
        $region44: #{tpu_custom_call.1} parent=39 // pred_fallthru
          _
        %s272 = sand.u32 %s26, 1
        %s273 = scalar_lea.sflag [#allocation6], %s272
        %s274 = sand.u32 %s60, 1
        %s275 = smul.addr %s274, 8
        %s276 = scalar_lea.vmem [#allocation5], %s275
        // Predicated region
        $region45: #{tpu_custom_call.1} parent=39 // pred_check
          %p277 = pneg %p73
        $region46: #{tpu_custom_call.1} parent=39 // pred_check_branch
          %279 = sbr.rel (%p277) target = $region48
        $region47: #{tpu_custom_call.1} parent=39 // pred_region
          %280 = dma.done %s273, 128
        $region48: #{tpu_custom_call.1} parent=39 // pred_fallthru
          _
        // Predicated region
        $region49: #{tpu_custom_call.1} parent=39 // pred_check
          %p281 = pneg %p94
        $region50: #{tpu_custom_call.1} parent=39 // pred_check_branch
          %283 = sbr.rel (%p281) target = $region52
        $region51: #{tpu_custom_call.1} parent=39 // pred_region
          %284 = dma.done [#allocation6], 2048
        $region52: #{tpu_custom_call.1} parent=39 // pred_fallthru
          _
        // Predicated region
        $region53: #{tpu_custom_call.1} parent=39 // pred_check
          %p285 = pneg %p115
        $region54: #{tpu_custom_call.1} parent=39 // pred_check_branch
          %287 = sbr.rel (%p285) target = $region56
        $region55: #{tpu_custom_call.1} parent=39 // pred_region
          %288 = dma.done [#allocation9], 4096
        $region56: #{tpu_custom_call.1} parent=39 // pred_fallthru
          _
        // Predicated region
        $region57: #{tpu_custom_call.1} parent=39 // pred_check
          %p289 = pneg %p136
        $region58: #{tpu_custom_call.1} parent=39 // pred_check_branch
          %291 = sbr.rel (%p289) target = $region60
        $region59: #{tpu_custom_call.1} parent=39 // pred_region
          %292 = dma.done [#allocation9], 4096
        $region60: #{tpu_custom_call.1} parent=39 // pred_fallthru
          _
        %s293 = sand.u32 %s34, 1
        %s294 = scalar_lea.sflag [#allocation3], %s293
        %s295 = sand.u32 %s34, 1
        %s296 = smul.addr %s295, 8
        %s297 = scalar_lea.vmem [#allocation2], %s296
        %p298 = pneg %p47
        %p299 = pneg %p44
        %s300 = sand.u32 %s26, 1
        %s301 = scalar_lea.sflag [#allocation6], %s300
        %s302 = sand.u32 %s60, 1
        %s303 = smul.addr %s302, 8
        %s304 = scalar_lea.vmem [#allocation5], %s303
        %p305 = pneg %p73
        %p306 = pneg %p70
        %p307 = pneg %p94
        %p308 = pneg %p91
        %p309 = pneg %p115
        %p310 = pneg %p112
        %p311 = pneg %p136
        %p312 = pneg %p133
        %p313 = pneg %p162
        %p314 = pneg %p159
        %s315 = sand.u32 %s149, 1
        %s316 = scalar_lea.sflag [#allocation4], %s315
        %s317 = sand.u32 %s149, 1
        %s318 = smul.addr %s317, 16
        %s319 = scalar_lea.vmem [#allocation11], %s318
        %v320 = vld [vmem:[%s276] sm:$0xff]
        %v321 = vld [vmem:[#allocation10] sm:$0xff]
        %v322 = vld [vmem:[#allocation10 + $0x8] sm:$0xff]
        %v323 = vld [vmem:[#allocation10 + $0x10] sm:$0xff]
        %v324 = vld [vmem:[#allocation10 + $0x18] sm:$0xff]
        %v325 = vld [vmem:[#allocation10 + $0x20] sm:$0xff]
        %v326 = vld [vmem:[#allocation10 + $0x28] sm:$0xff]
        %v327 = vld [vmem:[#allocation10 + $0x30] sm:$0xff]
        %v328 = vld [vmem:[#allocation10 + $0x38] sm:$0xff]
        %v329 = vld [vmem:[#allocation10 + $0x40] sm:$0xff]
        %v330 = vld [vmem:[#allocation10 + $0x48] sm:$0xff]
        %v331 = vld [vmem:[#allocation10 + $0x50] sm:$0xff]
        %v332 = vld [vmem:[#allocation10 + $0x58] sm:$0xff]
        %v333 = vld [vmem:[#allocation10 + $0x60] sm:$0xff]
        %v334 = vld [vmem:[#allocation10 + $0x68] sm:$0xff]
        %v335 = vld [vmem:[#allocation10 + $0x70] sm:$0xff]
        %v336 = vld [vmem:[#allocation10 + $0x78] sm:$0xff]
        %v337 = vld [vmem:[#allocation10 + $0x80] sm:$0xff]
        %v338 = vld [vmem:[#allocation10 + $0x88] sm:$0xff]
        %v339 = vld [vmem:[#allocation10 + $0x90] sm:$0xff]
        %v340 = vld [vmem:[#allocation10 + $0x98] sm:$0xff]
        %v341 = vld [vmem:[#allocation10 + $0xa0] sm:$0xff]
        %v342 = vld [vmem:[#allocation10 + $0xa8] sm:$0xff]
        %v343 = vld [vmem:[#allocation10 + $0xb0] sm:$0xff]
        %v344 = vld [vmem:[#allocation10 + $0xb8] sm:$0xff]
        %v345 = vld [vmem:[#allocation10 + $0xc0] sm:$0xff]
        %v346 = vld [vmem:[#allocation10 + $0xc8] sm:$0xff]
        %v347 = vld [vmem:[#allocation10 + $0xd0] sm:$0xff]
        %v348 = vld [vmem:[#allocation10 + $0xd8] sm:$0xff]
        %v349 = vld [vmem:[#allocation10 + $0xe0] sm:$0xff]
        %v350 = vld [vmem:[#allocation10 + $0xe8] sm:$0xff]
        %v351 = vld [vmem:[#allocation10 + $0xf0] sm:$0xff]
        %v352 = vld [vmem:[#allocation10 + $0xf8] sm:$0xff]
        %353 = vmatprep.subr.mxu0 %v322
        %354 = vmatpush1.msra.mxu0 %v321
        %355 = vmatprep.subr.mxu0 %v324
        %356 = vmatpush1.msra.mxu0 %v323
        %357 = vmatprep.subr.mxu0 %v326
        %358 = vmatpush1.msra.mxu0 %v325
        %359 = vmatprep.subr.mxu0 %v328
        %360 = vmatpush1.msra.mxu0 %v327
        %361 = vmatprep.subr.mxu0 %v330
        %362 = vmatpush1.msra.mxu0 %v329
        %363 = vmatprep.subr.mxu0 %v332
        %364 = vmatpush1.msra.mxu0 %v331
        %365 = vmatprep.subr.mxu0 %v334
        %366 = vmatpush1.msra.mxu0 %v333
        %367 = vmatprep.subr.mxu0 %v336
        %368 = vmatpush1.msra.mxu0 %v335
        %369 = vmatprep.subr.mxu0 %v338
        %370 = vmatpush1.msra.mxu0 %v337
        %371 = vmatprep.subr.mxu0 %v340
        %372 = vmatpush1.msra.mxu0 %v339
        %373 = vmatprep.subr.mxu0 %v342
        %374 = vmatpush1.msra.mxu0 %v341
        %375 = vmatprep.subr.mxu0 %v344
        %376 = vmatpush1.msra.mxu0 %v343
        %377 = vmatprep.subr.mxu0 %v346
        %378 = vmatpush1.msra.mxu0 %v345
        %379 = vmatprep.subr.mxu0 %v348
        %380 = vmatpush1.msra.mxu0 %v347
        %381 = vmatprep.subr.mxu0 %v350
        %382 = vmatpush1.msra.mxu0 %v349
        %383 = vmatprep.subr.mxu0 %v352
        %384 = vmatpush1.msra.mxu0 %v351
        %385 = vmatprep.subr.mxu0 0.0
        %386 = vmatpush1.msra.mxu0 0.0
        %387 = vmatprep.subr.mxu0 0.0
        %388 = vmatpush1.msra.mxu0 0.0
        %389 = vmatprep.subr.mxu0 0.0
        %390 = vmatpush1.msra.mxu0 0.0
        %391 = vmatprep.subr.mxu0 0.0
        %392 = vmatpush1.msra.mxu0 0.0
        %393 = vmatprep.subr.mxu0 0.0
        %394 = vmatpush1.msra.mxu0 0.0
        %395 = vmatprep.subr.mxu0 0.0
        %396 = vmatpush1.msra.mxu0 0.0
        %397 = vmatprep.subr.mxu0 0.0
        %398 = vmatpush1.msra.mxu0 0.0
        %399 = vmatprep.subr.mxu0 0.0
        %400 = vmatpush1.msra.mxu0 0.0
        %401 = vmatprep.subr.mxu0 0.0
        %402 = vmatpush1.msra.mxu0 0.0
        %403 = vmatprep.subr.mxu0 0.0
        %404 = vmatpush1.msra.mxu0 0.0
        %405 = vmatprep.subr.mxu0 0.0
        %406 = vmatpush1.msra.mxu0 0.0
        %407 = vmatprep.subr.mxu0 0.0
        %408 = vmatpush1.msra.mxu0 0.0
        %409 = vmatprep.subr.mxu0 0.0
        %410 = vmatpush1.msra.mxu0 0.0
        %411 = vmatprep.subr.mxu0 0.0
        %412 = vmatpush1.msra.mxu0 0.0
        %413 = vmatprep.subr.mxu0 0.0
        %414 = vmatpush1.msra.mxu0 0.0
        %415 = vmatprep.subr.mxu0 0.0
        %416 = vmatpush1.msra.mxu0 0.0
        %417 = vmatprep.mubr.f32.mxu0 0.0
        %418 = vmatmul.mubr.f32.gmra.mrb[0].mxu0 %v320
        %v419 = vpop.f32.mrb[0].mxu0
        %v420 = vadd.f32 0.0, %v419
        %v421 = vpop.f32.mrb[0].mxu0
        %v422 = vadd.f32 0.0, %v421
        %423 = vdwg.mxu0
        %v424 = vld [vmem:[%s267] sm:$0xff]
        %v425 = vmul.f32 %v424, %v424
        %v426 = vld [vmem:[#allocation7] sm:$0xff]
        %v427 = vld [vmem:[#allocation7 + $0x8] sm:$0xff]
        %v428 = vld [vmem:[#allocation7 + $0x10] sm:$0xff]
        %v429 = vld [vmem:[#allocation7 + $0x18] sm:$0xff]
        %v430 = vld [vmem:[#allocation7 + $0x20] sm:$0xff]
        %v431 = vld [vmem:[#allocation7 + $0x28] sm:$0xff]
        %v432 = vld [vmem:[#allocation7 + $0x30] sm:$0xff]
        %v433 = vld [vmem:[#allocation7 + $0x38] sm:$0xff]
        %v434 = vld [vmem:[#allocation7 + $0x40] sm:$0xff]
        %v435 = vld [vmem:[#allocation7 + $0x48] sm:$0xff]
        %v436 = vld [vmem:[#allocation7 + $0x50] sm:$0xff]
        %v437 = vld [vmem:[#allocation7 + $0x58] sm:$0xff]
        %v438 = vld [vmem:[#allocation7 + $0x60] sm:$0xff]
        %v439 = vld [vmem:[#allocation7 + $0x68] sm:$0xff]
        %v440 = vld [vmem:[#allocation7 + $0x70] sm:$0xff]
        %v441 = vld [vmem:[#allocation7 + $0x78] sm:$0xff]
        %442 = vmatprep.subr.mxu0 0.0
        %443 = vmatpush1.msra.mxu0 %v426
        %444 = vmatprep.subr.mxu0 0.0
        %445 = vmatpush1.msra.mxu0 %v427
        %446 = vmatprep.subr.mxu0 0.0
        %447 = vmatpush1.msra.mxu0 %v428
        %448 = vmatprep.subr.mxu0 0.0
        %449 = vmatpush1.msra.mxu0 %v429
        %450 = vmatprep.subr.mxu0 0.0
        %451 = vmatpush1.msra.mxu0 %v430
        %452 = vmatprep.subr.mxu0 0.0
        %453 = vmatpush1.msra.mxu0 %v431
        %454 = vmatprep.subr.mxu0 0.0
        %455 = vmatpush1.msra.mxu0 %v432
        %456 = vmatprep.subr.mxu0 0.0
        %457 = vmatpush1.msra.mxu0 %v433
        %458 = vmatprep.subr.mxu0 0.0
        %459 = vmatpush1.msra.mxu0 %v434
        %460 = vmatprep.subr.mxu0 0.0
        %461 = vmatpush1.msra.mxu0 %v435
        %462 = vmatprep.subr.mxu0 0.0
        %463 = vmatpush1.msra.mxu0 %v436
        %464 = vmatprep.subr.mxu0 0.0
        %465 = vmatpush1.msra.mxu0 %v437
        %466 = vmatprep.subr.mxu0 0.0
        %467 = vmatpush1.msra.mxu0 %v438
        %468 = vmatprep.subr.mxu0 0.0
        %469 = vmatpush1.msra.mxu0 %v439
        %470 = vmatprep.subr.mxu0 0.0
        %471 = vmatpush1.msra.mxu0 %v440
        %472 = vmatprep.subr.mxu0 0.0
        %473 = vmatpush1.msra.mxu0 %v441
        %474 = vmatprep.subr.mxu0 0.0
        %475 = vmatpush1.msra.mxu0 0.0
        %476 = vmatprep.subr.mxu0 0.0
        %477 = vmatpush1.msra.mxu0 0.0
        %478 = vmatprep.subr.mxu0 0.0
        %479 = vmatpush1.msra.mxu0 0.0
        %480 = vmatprep.subr.mxu0 0.0
        %481 = vmatpush1.msra.mxu0 0.0
        %482 = vmatprep.subr.mxu0 0.0
        %483 = vmatpush1.msra.mxu0 0.0
        %484 = vmatprep.subr.mxu0 0.0
        %485 = vmatpush1.msra.mxu0 0.0
        %486 = vmatprep.subr.mxu0 0.0
        %487 = vmatpush1.msra.mxu0 0.0
        %488 = vmatprep.subr.mxu0 0.0
        %489 = vmatpush1.msra.mxu0 0.0
        %490 = vmatprep.subr.mxu0 0.0
        %491 = vmatpush1.msra.mxu0 0.0
        %492 = vmatprep.subr.mxu0 0.0
        %493 = vmatpush1.msra.mxu0 0.0
        %494 = vmatprep.subr.mxu0 0.0
        %495 = vmatpush1.msra.mxu0 0.0
        %496 = vmatprep.subr.mxu0 0.0
        %497 = vmatpush1.msra.mxu0 0.0
        %498 = vmatprep.subr.mxu0 0.0
        %499 = vmatpush1.msra.mxu0 0.0
        %500 = vmatprep.subr.mxu0 0.0
        %501 = vmatpush1.msra.mxu0 0.0
        %502 = vmatprep.subr.mxu0 0.0
        %503 = vmatpush1.msra.mxu0 0.0
        %504 = vmatprep.subr.mxu0 0.0
        %505 = vmatpush1.msra.mxu0 0.0
        %506 = vmatprep.mubr.f32.mxu0 0.0
        %507 = vmatmul.mubr.f32.gmra.mrb[0].mxu0 %v425
        %v508 = vpop.f32.mrb[0].mxu0
        %v509 = vadd.f32 0.0, %v508
        %v510 = vpop.f32.mrb[0].mxu0
        %511 = vdwg.mxu0
        %v512 = vmax.f32 %v509, 1e-24
        %v513 = vrsqrt.pop %v512
        %v514 = vmul.f32 %v424, %v513
        %v515 = vld [vmem:[#allocation8] sm:$0xff]
        %v516 = vld [vmem:[#allocation8 + $0x8] sm:$0xff]
        %v517 = vld [vmem:[#allocation8 + $0x10] sm:$0xff]
        %v518 = vld [vmem:[#allocation8 + $0x18] sm:$0xff]
        %v519 = vld [vmem:[#allocation8 + $0x20] sm:$0xff]
        %v520 = vld [vmem:[#allocation8 + $0x28] sm:$0xff]
        %v521 = vld [vmem:[#allocation8 + $0x30] sm:$0xff]
        %v522 = vld [vmem:[#allocation8 + $0x38] sm:$0xff]
        %v523 = vld [vmem:[#allocation8 + $0x40] sm:$0xff]
        %v524 = vld [vmem:[#allocation8 + $0x48] sm:$0xff]
        %v525 = vld [vmem:[#allocation8 + $0x50] sm:$0xff]
        %v526 = vld [vmem:[#allocation8 + $0x58] sm:$0xff]
        %v527 = vld [vmem:[#allocation8 + $0x60] sm:$0xff]
        %v528 = vld [vmem:[#allocation8 + $0x68] sm:$0xff]
        %v529 = vld [vmem:[#allocation8 + $0x70] sm:$0xff]
        %v530 = vld [vmem:[#allocation8 + $0x78] sm:$0xff]
        %v531 = vld [vmem:[#allocation8 + $0x80] sm:$0xff]
        %v532 = vld [vmem:[#allocation8 + $0x88] sm:$0xff]
        %v533 = vld [vmem:[#allocation8 + $0x90] sm:$0xff]
        %v534 = vld [vmem:[#allocation8 + $0x98] sm:$0xff]
        %v535 = vld [vmem:[#allocation8 + $0xa0] sm:$0xff]
        %v536 = vld [vmem:[#allocation8 + $0xa8] sm:$0xff]
        %v537 = vld [vmem:[#allocation8 + $0xb0] sm:$0xff]
        %v538 = vld [vmem:[#allocation8 + $0xb8] sm:$0xff]
        %v539 = vld [vmem:[#allocation8 + $0xc0] sm:$0xff]
        %v540 = vld [vmem:[#allocation8 + $0xc8] sm:$0xff]
        %v541 = vld [vmem:[#allocation8 + $0xd0] sm:$0xff]
        %v542 = vld [vmem:[#allocation8 + $0xd8] sm:$0xff]
        %v543 = vld [vmem:[#allocation8 + $0xe0] sm:$0xff]
        %v544 = vld [vmem:[#allocation8 + $0xe8] sm:$0xff]
        %v545 = vld [vmem:[#allocation8 + $0xf0] sm:$0xff]
        %v546 = vld [vmem:[#allocation8 + $0xf8] sm:$0xff]
        %547 = vmatprep.subr.mxu0 %v516
        %548 = vmatpush1.msra.mxu0 %v515
        %549 = vmatprep.subr.mxu0 %v518
        %550 = vmatpush1.msra.mxu0 %v517
        %551 = vmatprep.subr.mxu0 %v520
        %552 = vmatpush1.msra.mxu0 %v519
        %553 = vmatprep.subr.mxu0 %v522
        %554 = vmatpush1.msra.mxu0 %v521
        %555 = vmatprep.subr.mxu0 %v524
        %556 = vmatpush1.msra.mxu0 %v523
        %557 = vmatprep.subr.mxu0 %v526
        %558 = vmatpush1.msra.mxu0 %v525
        %559 = vmatprep.subr.mxu0 %v528
        %560 = vmatpush1.msra.mxu0 %v527
        %561 = vmatprep.subr.mxu0 %v530
        %562 = vmatpush1.msra.mxu0 %v529
        %563 = vmatprep.subr.mxu0 %v532
        %564 = vmatpush1.msra.mxu0 %v531
        %565 = vmatprep.subr.mxu0 %v534
        %566 = vmatpush1.msra.mxu0 %v533
        %567 = vmatprep.subr.mxu0 %v536
        %568 = vmatpush1.msra.mxu0 %v535
        %569 = vmatprep.subr.mxu0 %v538
        %570 = vmatpush1.msra.mxu0 %v537
        %571 = vmatprep.subr.mxu0 %v540
        %572 = vmatpush1.msra.mxu0 %v539
        %573 = vmatprep.subr.mxu0 %v542
        %574 = vmatpush1.msra.mxu0 %v541
        %575 = vmatprep.subr.mxu0 %v544
        %576 = vmatpush1.msra.mxu0 %v543
        %577 = vmatprep.subr.mxu0 %v546
        %578 = vmatpush1.msra.mxu0 %v545
        %579 = vmatprep.subr.mxu0 0.0
        %580 = vmatpush1.msra.mxu0 0.0
        %581 = vmatprep.subr.mxu0 0.0
        %582 = vmatpush1.msra.mxu0 0.0
        %583 = vmatprep.subr.mxu0 0.0
        %584 = vmatpush1.msra.mxu0 0.0
        %585 = vmatprep.subr.mxu0 0.0
        %586 = vmatpush1.msra.mxu0 0.0
        %587 = vmatprep.subr.mxu0 0.0
        %588 = vmatpush1.msra.mxu0 0.0
        %589 = vmatprep.subr.mxu0 0.0
        %590 = vmatpush1.msra.mxu0 0.0
        %591 = vmatprep.subr.mxu0 0.0
        %592 = vmatpush1.msra.mxu0 0.0
        %593 = vmatprep.subr.mxu0 0.0
        %594 = vmatpush1.msra.mxu0 0.0
        %595 = vmatprep.subr.mxu0 0.0
        %596 = vmatpush1.msra.mxu0 0.0
        %597 = vmatprep.subr.mxu0 0.0
        %598 = vmatpush1.msra.mxu0 0.0
        %599 = vmatprep.subr.mxu0 0.0
        %600 = vmatpush1.msra.mxu0 0.0
        %601 = vmatprep.subr.mxu0 0.0
        %602 = vmatpush1.msra.mxu0 0.0
        %603 = vmatprep.subr.mxu0 0.0
        %604 = vmatpush1.msra.mxu0 0.0
        %605 = vmatprep.subr.mxu0 0.0
        %606 = vmatpush1.msra.mxu0 0.0
        %607 = vmatprep.subr.mxu0 0.0
        %608 = vmatpush1.msra.mxu0 0.0
        %609 = vmatprep.subr.mxu0 0.0
        %610 = vmatpush1.msra.mxu0 0.0
        %611 = vmatprep.mubr.f32.mxu0 0.0
        %612 = vmatmul.mubr.f32.gmra.mrb[0].mxu0 %v514
        %v613 = vpop.f32.mrb[0].mxu0
        %v614 = vadd.f32 %v420, %v613
        %v615 = vpop.f32.mrb[0].mxu0
        %v616 = vadd.f32 %v422, %v615
        %617 = vdwg.mxu0
        %618 = vst [vmem:[%s319] sm:$0xff] %v614
        %619 = vst [vmem:[%s319 + $0x8] sm:$0xff] %v616
        %s620 = sand.u32 %s149, 1
        %s621 = scalar_lea.sflag [#allocation4], %s620
        %s622 = sand.u32 %s149, 1
        %s623 = smul.addr %s622, 16
        %s624 = scalar_lea.vmem [#allocation11], %s623
        // Predicated region
        $region61: #{tpu_custom_call.1} parent=39 // pred_check
          %p625 = pneg %p159
        $region62: #{tpu_custom_call.1} parent=39 // pred_check_branch
          %627 = sbr.rel (%p625) target = $region64
        $region63: #{tpu_custom_call.1} parent=39 // pred_region
          %s629 = ssub.s32 256, 256
          %630 = vsyncadd %s621, %s629
          %s631 = smul.addr %s26, 2
          %s632 = smul.addr %s631, 128
          %s633 = scalar_lea.hbm %s5, %s632
          %s635 = sshll.u32 %s624, 4
          %s636 = int_to_ptr.vmem [resolvable:$true] %s635
          %638 = dma.vmem_to_hbm [thread:$0]  %s636, 256, %s633, %s621
        $region64: #{tpu_custom_call.1} parent=39 // pred_fallthru
          _
      $region40: #{tpu_custom_call.1} parent=5 // pred_fallthru
        _
      %p639 = scmp.le.s32.totalorder 2, %s21
      // Predicated region
      $region65: #{tpu_custom_call.1} parent=5 // pred_check
        %p640 = pneg %p639
      $region66: #{tpu_custom_call.1} parent=5 // pred_check_branch
        %642 = sbr.rel (%p640) target = $region68
      $region67: #{tpu_custom_call.1} parent=5 // pred_region
        %s643 = ssub.s32 %s21, 2
        // Predicated region
        $region69: #{tpu_custom_call.1} parent=67 // pred_check
          %p644 = pneg %p165
        $region70: #{tpu_custom_call.1} parent=67 // pred_check_branch
          %646 = sbr.rel (%p644) target = $region72
        $region71: #{tpu_custom_call.1} parent=67 // pred_region
          %s647 = sand.u32 %s150, 1
          %s648 = scalar_lea.sflag [#allocation4], %s647
          %s649 = sand.u32 %s150, 1
          %s650 = smul.addr %s649, 16
          %s651 = scalar_lea.vmem [#allocation11], %s650
          %652 = dma.done %s648, 256
        $region72: #{tpu_custom_call.1} parent=67 // pred_fallthru
          _
      $region68: #{tpu_custom_call.1} parent=5 // pred_fallthru
        _
    $region6: #{tpu_custom_call.1} parent=1 // loop_footer
      %s25 = sadd.s32 1, %s21
    $region7: #{tpu_custom_call.1} parent=1 // loop_footer_branch
      %20 = sbr.rel target = $region3
    $region8: #{tpu_custom_call.1} parent=1 // loop_exit
      _
    %653 = vsyncpa [#allocation3], 1
    %s654 = scalar_lea.sflag [#allocation3], 1
    %655 = vsyncpa %s654, 1
    %656 = vsyncpa [#allocation6], 1
    %s657 = scalar_lea.sflag [#allocation6], 1
    %658 = vsyncpa %s657, 1
    %659 = vsyncpa [#allocation9], 1
    %660 = vsyncpa [#allocation4], 1
    %s661 = scalar_lea.sflag [#allocation4], 1
    %662 = vsyncpa %s661, 1

</llo_original>
